<compile_context>
chip_gen: v6e
topology: v6e:2x2x1
jax: 0.10.0
libtpu: 0.0.40
codegen_flags: <defaults>
</compile_context>

<pallas_src>
import math
import numpy as np
import jax
import jax.numpy as jnp
from jax.experimental import pallas as pl
from jax.experimental.pallas import tpu as pltpu


def _round_up(n, m):
    return (n + m - 1) // m * m


def make_fca_kernel(k):
    pad = k // 2

    def fca_kernel(mf_ref, x_ref, wt_ref, b_ref, tap_ref, y_ref, attn_ref):
        x_in = x_ref[...]                               # [TB, Cp] input dtype
        Cp = x_in.shape[1]
        xf = x_in.astype(jnp.float32)

        # Tap-weight*mask rows, hoisted once.  tap[j, c] folds in Conv1d's zero
        # padding (input index in [0, C)) AND the lane-padding output mask
        # (c < C), so padded lanes of x1 are exactly 0 and the row-sums below
        # see no contamination.
        tap_rows = [tap_ref[pl.ds(j, 1), :] for j in range(k)]   # each [1, Cp] f32

        def conv1d(v):
            acc = tap_rows[pad] * v                     # centre tap (offset 0)
            for j in range(k):
                off = j - pad
                if off == 0:
                    continue
                rolled = pltpu.roll(v, shift=(-off) % Cp, axis=1)   # XLU slot
                acc = acc + tap_rows[j] * rolled
            return acc

        def sigmoid(v):                                 # one EUP op / element
            return 0.5 * jnp.tanh(0.5 * v) + 0.5

        # x1 = conv1(x) over the channel axis                         [TB, Cp]
        x1 = conv1d(xf)
        # x2 = fc(x) = x @ W.T + b ; bf16 operands on the MXU, f32 accumulate.
        x2 = jnp.dot(x_in.astype(jnp.bfloat16), wt_ref[...],
                     preferred_element_type=jnp.float32) + b_ref[...]

        # sum_i outer(x1, x2)[i, :] == x2 * sum(x1); symmetric for out2.
        # Padded lanes of x1 (tap mask) and x2 (zero W rows / bias) are 0.
        s1 = jnp.sum(x1, axis=1, keepdims=True)         # [TB, 1]
        s2 = jnp.sum(x2, axis=1, keepdims=True)         # [TB, 1]
        out1 = sigmoid(x2 * s1)                         # [TB, Cp]
        out2 = sigmoid(x1 * s2)                         # [TB, Cp]

        # Mix: mf = sigmoid(mix_w) precomputed in the wrapper; FMA blend form.
        mf = mf_ref[0]
        mixed = out2 + mf * (out1 - out2)

        # Final conv1 + sigmoid -> attention weights.  The tap mask restricts
        # reads to real input columns, so the 0.5 values sitting in padded
        # lanes of `mixed` never reach real output lanes.
        attn = sigmoid(conv1d(mixed))

        attn_ref[...] = attn.astype(attn_ref.dtype)
        y_ref[...] = (xf * attn).astype(y_ref.dtype)

    return fca_kernel


def fc_attention(x, conv_w, fc_w, fc_b, mix_w):
    """x: [B, C]. conv_w: [k], fc_w: [C, C], fc_b: [C], mix_w: [1]."""
    B, C = x.shape
    k = int(conv_w.shape[0])
    pad = k // 2
    in_dtype = x.dtype
    f32 = jnp.float32

    # Lane-dense channel padding (skipped when C is already 128-aligned).
    C_pad = C if C % 128 == 0 else _round_up(C, 128)

    # Bigger batch tiles when the channel tile is small (amortize per-grid-step
    # overhead); never overshoot B by more than the 8-sublane alignment.
    if C_pad <= 512:
        tb_target = 1024
    elif C_pad <= 1024:
        tb_target = 512
    else:
        tb_target = 256
    TILE_B = min(tb_target, _round_up(B, 8))
    B_pad = _round_up(B, TILE_B)

    needs_pad = (B_pad != B) or (C_pad != C)
    xp = (jnp.zeros((B_pad, C_pad), in_dtype).at[:B, :C].set(x)
          if needs_pad else x)

    # fc weight: pre-transpose once (plain NN contraction in the kernel, no
    # per-step relayout of the resident block) and cast to bf16 for the MXU.
    wt = jnp.zeros((C_pad, C_pad), jnp.bfloat16).at[:C, :C].set(
        fc_w.T.astype(jnp.bfloat16))
    bp = jnp.zeros((1, C_pad), f32).at[0, :C].set(fc_b.astype(f32))

    # [k, C_pad] tap-weight table with Conv1d zero padding and the padded
    # output-column mask folded in.
    col = jnp.arange(C_pad)
    rows = []
    for j in range(k):
        off = j - pad
        valid = (col < C) & (col + off >= 0) & (col + off < C)
        rows.append(jnp.where(valid, conv_w[j].astype(f32), 0.0))
    tap = jnp.stack(rows, axis=0)                       # [k, C_pad] f32

    # Mix factor is a per-call constant: sigmoid once, outside the kernel.
    mf = jax.nn.sigmoid(mix_w.astype(f32)).reshape(1)

    # Grid-invariant W^T does not benefit from double buffering; drop to a
    # single buffer once it is the dominant VMEM allocation (v7x: 64 MiB/TC).
    single_buffer_w = C_pad >= 2048
    w_spec_kwargs = {"pipeline_mode": pl.Buffered(1)} if single_buffer_w else {}

    # VMEM budget from the actual footprint (+headroom), clamped to safe caps.
    tile_elems = TILE_B * C_pad
    isz = np.dtype(in_dtype).itemsize
    footprint = (
        (1 if single_buffer_w else 2) * C_pad * C_pad * 2      # W^T (bf16)
        + 2 * C_pad * 4                                         # bias
        + 2 * k * C_pad * 4                                     # tap table
        + 2 * tile_elems * isz                                  # x tile (dbl buf)
        + 2 * 2 * tile_elems * isz                              # y + attn tiles
    )
    vmem_limit = int(min(96 * 2 ** 20,
                         max(32 * 2 ** 20, footprint * 3 // 2 + (8 << 20))))

    kernel = make_fca_kernel(k)
    grid = (B_pad // TILE_B,)
    out_shape = (jax.ShapeDtypeStruct((B_pad, C_pad), in_dtype),   # x * attn
                 jax.ShapeDtypeStruct((B_pad, C_pad), in_dtype))   # attn

    y_pad, attn_pad = pl.pallas_call(
        kernel,
        out_shape=out_shape,
        grid=grid,
        in_specs=[
            pl.BlockSpec(memory_space=pltpu.MemorySpace.SMEM),      # mf (1,)
            pl.BlockSpec((TILE_B, C_pad), lambda i: (i, 0)),        # x tile
            pl.BlockSpec((C_pad, C_pad), lambda i: (0, 0),          # W^T resident
                         **w_spec_kwargs),
            pl.BlockSpec((1, C_pad), lambda i: (0, 0)),             # bias resident
            pl.BlockSpec((k, C_pad), lambda i: (0, 0)),             # tap table
        ],
        out_specs=(pl.BlockSpec((TILE_B, C_pad), lambda i: (i, 0)),
                   pl.BlockSpec((TILE_B, C_pad), lambda i: (i, 0))),
        compiler_params=pltpu.CompilerParams(
            # On v7x switch to CORE_PARALLEL / core_map if plain "parallel"
            # does not shard the batch grid across the 2 TensorCores.
            dimension_semantics=("parallel",),
            vmem_limit_bytes=vmem_limit),
    )(mf, xp, wt, bp, tap)

    if needs_pad:
        return y_pad[:B, :C], attn_pad[:B, :C]
    return y_pad, attn_pad


def fc_attention_ref(x, conv_w, fc_w, fc_b, mix_w, matmul_dtype=jnp.float32):
    """Pure-JAX reference mirroring the PyTorch forward for a [B, C] input.

    matmul_dtype=bfloat16 reproduces the kernel's MXU numerics (f32 accumulate).
    """
    k = conv_w.shape[0]
    pad = k // 2
    C = x.shape[1]

    def conv1d(v):
        vp = jnp.pad(v, ((0, 0), (pad, pad)))
        return sum(conv_w[j] * vp[:, j:j + C] for j in range(k))

    x1 = conv1d(x)
    x2 = jnp.dot(x.astype(matmul_dtype), fc_w.T.astype(matmul_dtype),
                 preferred_element_type=jnp.float32) + fc_b
    out1 = jax.nn.sigmoid(x2 * jnp.sum(x1, axis=1, keepdims=True))
    out2 = jax.nn.sigmoid(x1 * jnp.sum(x2, axis=1, keepdims=True))
    mf = jax.nn.sigmoid(mix_w[0])
    mixed = out1 * mf + out2 * (1.0 - mf)
    attn = jax.nn.sigmoid(conv1d(mixed))
    return x * attn, attn


if __name__ == "__main__":
    B, nfeat = 2, 32
    b_hyper, gamma = 1, 2
    t = int(abs((math.log(nfeat, 2) + b_hyper) / gamma))
    k = t if t % 2 else t + 1                            # nfeat=32 -> k=3

    key = jax.random.PRNGKey(0)
    kx, kc, kw, kb = jax.random.split(key, 4)

    x = jax.random.normal(kx, (B, nfeat), dtype=jnp.float32)
    # conv1: Conv1d(1, 1, k, bias=False) weight [1, 1, k] -> stored flat [k]
    conv_w = jax.random.normal(kc, (k,), dtype=jnp.float32) * 0.3
    # fc: Conv2d(nfeat, nfeat, 1, bias=True) weight [C, C, 1, 1] -> [C, C]
    fc_w = jax.random.normal(kw, (nfeat, nfeat), dtype=jnp.float32) * (1.0 / math.sqrt(nfeat))
    fc_b = jax.random.normal(kb, (nfeat,), dtype=jnp.float32) * 0.1
    # Mix: w initialized to -0.8
    mix_w = jnp.array([-0.8], dtype=jnp.float32)

    y, attn = fc_attention(x, conv_w, fc_w, fc_b, mix_w)
    jax.block_until_ready((y, attn))

    # Tight check against a reference using the same bf16-matmul numerics.
    y_mx, attn_mx = fc_attention_ref(x, conv_w, fc_w, fc_b, mix_w,
                                     matmul_dtype=jnp.bfloat16)
    np.testing.assert_allclose(np.asarray(attn), np.asarray(attn_mx), rtol=2e-3, atol=2e-3)
    np.testing.assert_allclose(np.asarray(y), np.asarray(y_mx), rtol=2e-3, atol=2e-3)

    # Loose sanity check against the exact full-f32 PyTorch semantics
    # (only difference is the bf16 MXU matmul).
    y_f32, attn_f32 = fc_attention_ref(x, conv_w, fc_w, fc_b, mix_w)
    np.testing.assert_allclose(np.asarray(attn), np.asarray(attn_f32), rtol=2e-2, atol=2e-2)
    np.testing.assert_allclose(np.asarray(y), np.asarray(y_f32), rtol=2e-2, atol=2e-2)

    print("KERNEL_OK")
</pallas_src>

<mosaic_0001>
module attributes {stable_mosaic.version = 11 : i64} {
  func.func @fca_kernel(%arg0: i32, %arg1: memref<1xf32, #tpu.memory_space<smem>>, %arg2: memref<8x128xf32, #tpu.memory_space<vmem>>, %arg3: memref<128x128xbf16, #tpu.memory_space<vmem>>, %arg4: memref<1x128xf32, #tpu.memory_space<vmem>>, %arg5: memref<3x128xf32, #tpu.memory_space<vmem>>, %arg6: memref<8x128xf32, #tpu.memory_space<vmem>>, %arg7: memref<8x128xf32, #tpu.memory_space<vmem>>) attributes {dimension_semantics = [#tpu.dimension_semantics<parallel>], iteration_bounds = array<i64: 1>, scalar_prefetch = 0 : i64, scratch_operands = 0 : i64, tpu.core_type = #tpu.core_type<tc>, window_params = [{transform_indices = @transform_0, window_bounds = array<i64: 1>}, {transform_indices = @transform_1, window_bounds = array<i64: 8, 128>}, {pipeline_mode = #tpu.pipeline_mode<synchronous>, transform_indices = @transform_2, window_bounds = array<i64: 128, 128>}, {pipeline_mode = #tpu.pipeline_mode<synchronous>, transform_indices = @transform_3, window_bounds = array<i64: 1, 128>}, {pipeline_mode = #tpu.pipeline_mode<synchronous>, transform_indices = @transform_4, window_bounds = array<i64: 3, 128>}, {transform_indices = @transform_5, window_bounds = array<i64: 8, 128>}, {transform_indices = @transform_6, window_bounds = array<i64: 8, 128>}]} {
    %c0 = arith.constant 0 : index
    %c0_0 = arith.constant 0 : index
    %0 = vector.load %arg2[%c0, %c0_0] : memref<8x128xf32, #tpu.memory_space<vmem>>, vector<8x128xf32>
    %c0_1 = arith.constant 0 : index
    %c0_2 = arith.constant 0 : index
    %1 = vector.load %arg5[%c0_1, %c0_2] : memref<3x128xf32, #tpu.memory_space<vmem>>, vector<1x128xf32>
    %c1 = arith.constant 1 : index
    %c0_3 = arith.constant 0 : index
    %2 = vector.load %arg5[%c1, %c0_3] : memref<3x128xf32, #tpu.memory_space<vmem>>, vector<1x128xf32>
    %c2 = arith.constant 2 : index
    %c0_4 = arith.constant 0 : index
    %3 = vector.load %arg5[%c2, %c0_4] : memref<3x128xf32, #tpu.memory_space<vmem>>, vector<1x128xf32>
    %4 = vector.broadcast %2 : vector<1x128xf32> to vector<8x128xf32>
    %5 = arith.mulf %4, %0 : vector<8x128xf32>
    %c1_i32 = arith.constant 1 : i32
    %6 = tpu.dynamic_rotate %0 by %c1_i32 dim 1 : vector<8x128xf32>, i32 -> vector<8x128xf32>
    %7 = vector.broadcast %1 : vector<1x128xf32> to vector<8x128xf32>
    %8 = arith.mulf %7, %6 : vector<8x128xf32>
    %9 = arith.addf %5, %8 : vector<8x128xf32>
    %c127_i32 = arith.constant 127 : i32
    %10 = tpu.dynamic_rotate %0 by %c127_i32 dim 1 : vector<8x128xf32>, i32 -> vector<8x128xf32>
    %11 = vector.broadcast %3 : vector<1x128xf32> to vector<8x128xf32>
    %12 = arith.mulf %11, %10 : vector<8x128xf32>
    %13 = arith.addf %9, %12 : vector<8x128xf32>
    %14 = arith.truncf %0 : vector<8x128xf32> to vector<8x128xbf16>
    %c0_5 = arith.constant 0 : index
    %c0_6 = arith.constant 0 : index
    %15 = vector.load %arg3[%c0_5, %c0_6] : memref<128x128xbf16, #tpu.memory_space<vmem>>, vector<128x128xbf16>
    %cst = arith.constant dense<0.000000e+00> : vector<8x128xf32>
    %16 = tpu.matmul %14, %15, %cst {dimension_numbers = #tpu.dot_dimension_numbers<[1], [0], [0], [1], [0, 0, 1, 1], [], []>} : vector<8x128xbf16>, vector<128x128xbf16>, vector<8x128xf32> -> vector<8x128xf32>
    %c0_7 = arith.constant 0 : index
    %c0_8 = arith.constant 0 : index
    %17 = vector.load %arg4[%c0_7, %c0_8] : memref<1x128xf32, #tpu.memory_space<vmem>>, vector<1x128xf32>
    %18 = vector.broadcast %17 : vector<1x128xf32> to vector<8x128xf32>
    %19 = arith.addf %16, %18 : vector<8x128xf32>
    %cst_9 = arith.constant dense<0.000000e+00> : vector<8xf32>
    %20 = vector.multi_reduction <add>, %13, %cst_9 [1] : vector<8x128xf32> to vector<8xf32>
    %21 = vector.shape_cast %20 : vector<8xf32> to vector<8x1xf32>
    %cst_10 = arith.constant dense<0.000000e+00> : vector<8xf32>
    %22 = vector.multi_reduction <add>, %19, %cst_10 [1] : vector<8x128xf32> to vector<8xf32>
    %23 = vector.shape_cast %22 : vector<8xf32> to vector<8x1xf32>
    %24 = vector.broadcast %21 : vector<8x1xf32> to vector<8x128xf32>
    %25 = arith.mulf %19, %24 : vector<8x128xf32>
    %cst_11 = arith.constant 5.000000e-01 : f32
    %26 = vector.broadcast %cst_11 : f32 to vector<8x128xf32>
    %27 = arith.mulf %26, %25 : vector<8x128xf32>
    %28 = math.tanh %27 : vector<8x128xf32>
    %cst_12 = arith.constant 5.000000e-01 : f32
    %29 = vector.broadcast %cst_12 : f32 to vector<8x128xf32>
    %30 = arith.mulf %29, %28 : vector<8x128xf32>
    %cst_13 = arith.constant 5.000000e-01 : f32
    %31 = vector.broadcast %cst_13 : f32 to vector<8x128xf32>
    %32 = arith.addf %30, %31 : vector<8x128xf32>
    %33 = vector.broadcast %23 : vector<8x1xf32> to vector<8x128xf32>
    %34 = arith.mulf %13, %33 : vector<8x128xf32>
    %cst_14 = arith.constant 5.000000e-01 : f32
    %35 = vector.broadcast %cst_14 : f32 to vector<8x128xf32>
    %36 = arith.mulf %35, %34 : vector<8x128xf32>
    %37 = math.tanh %36 : vector<8x128xf32>
    %cst_15 = arith.constant 5.000000e-01 : f32
    %38 = vector.broadcast %cst_15 : f32 to vector<8x128xf32>
    %39 = arith.mulf %38, %37 : vector<8x128xf32>
    %cst_16 = arith.constant 5.000000e-01 : f32
    %40 = vector.broadcast %cst_16 : f32 to vector<8x128xf32>
    %41 = arith.addf %39, %40 : vector<8x128xf32>
    %c0_17 = arith.constant 0 : index
    %42 = memref.load %arg1[%c0_17] : memref<1xf32, #tpu.memory_space<smem>>
    %43 = arith.subf %32, %41 : vector<8x128xf32>
    %44 = vector.broadcast %42 : f32 to vector<8x128xf32>
    %45 = arith.mulf %44, %43 : vector<8x128xf32>
    %46 = arith.addf %41, %45 : vector<8x128xf32>
    %47 = vector.broadcast %2 : vector<1x128xf32> to vector<8x128xf32>
    %48 = arith.mulf %47, %46 : vector<8x128xf32>
    %c1_i32_18 = arith.constant 1 : i32
    %49 = tpu.dynamic_rotate %46 by %c1_i32_18 dim 1 : vector<8x128xf32>, i32 -> vector<8x128xf32>
    %50 = vector.broadcast %1 : vector<1x128xf32> to vector<8x128xf32>
    %51 = arith.mulf %50, %49 : vector<8x128xf32>
    %52 = arith.addf %48, %51 : vector<8x128xf32>
    %c127_i32_19 = arith.constant 127 : i32
    %53 = tpu.dynamic_rotate %46 by %c127_i32_19 dim 1 : vector<8x128xf32>, i32 -> vector<8x128xf32>
    %54 = vector.broadcast %3 : vector<1x128xf32> to vector<8x128xf32>
    %55 = arith.mulf %54, %53 : vector<8x128xf32>
    %56 = arith.addf %52, %55 : vector<8x128xf32>
    %cst_20 = arith.constant 5.000000e-01 : f32
    %57 = vector.broadcast %cst_20 : f32 to vector<8x128xf32>
    %58 = arith.mulf %57, %56 : vector<8x128xf32>
    %59 = math.tanh %58 : vector<8x128xf32>
    %cst_21 = arith.constant 5.000000e-01 : f32
    %60 = vector.broadcast %cst_21 : f32 to vector<8x128xf32>
    %61 = arith.mulf %60, %59 : vector<8x128xf32>
    %cst_22 = arith.constant 5.000000e-01 : f32
    %62 = vector.broadcast %cst_22 : f32 to vector<8x128xf32>
    %63 = arith.addf %61, %62 : vector<8x128xf32>
    %c0_23 = arith.constant 0 : index
    %c0_24 = arith.constant 0 : index
    %64 = vector.load %arg7[%c0_23, %c0_24] : memref<8x128xf32, #tpu.memory_space<vmem>>, vector<8x128xf32>
    tpu.vector_store %arg7[%c0_23, %c0_24], %63 {strides = array<i32>} : memref<8x128xf32, #tpu.memory_space<vmem>>, vector<8x128xf32>,
    %65 = arith.mulf %0, %63 : vector<8x128xf32>
    %c0_25 = arith.constant 0 : index
    %c0_26 = arith.constant 0 : index
    %66 = vector.load %arg6[%c0_25, %c0_26] : memref<8x128xf32, #tpu.memory_space<vmem>>, vector<8x128xf32>
    tpu.vector_store %arg6[%c0_25, %c0_26], %65 {strides = array<i32>} : memref<8x128xf32, #tpu.memory_space<vmem>>, vector<8x128xf32>,
    return
  }
  func.func @transform_0(%arg0: i32) -> i32 {
    %c0_i32 = arith.constant 0 : i32
    %c0_i32_0 = arith.constant 0 : i32
    return %c0_i32 : i32
  }
  func.func @transform_1(%arg0: i32) -> (i32, i32) {
    %c0_i32 = arith.constant 0 : i32
    %c0_i32_0 = arith.constant 0 : i32
    return %arg0, %c0_i32 : i32, i32
  }
  func.func @transform_2(%arg0: i32) -> (i32, i32) {
    %c0_i32 = arith.constant 0 : i32
    %c0_i32_0 = arith.constant 0 : i32
    %c0_i32_1 = arith.constant 0 : i32
    return %c0_i32, %c0_i32_0 : i32, i32
  }
  func.func @transform_3(%arg0: i32) -> (i32, i32) {
    %c0_i32 = arith.constant 0 : i32
    %c0_i32_0 = arith.constant 0 : i32
    %c0_i32_1 = arith.constant 0 : i32
    return %c0_i32, %c0_i32_0 : i32, i32
  }
  func.func @transform_4(%arg0: i32) -> (i32, i32) {
    %c0_i32 = arith.constant 0 : i32
    %c0_i32_0 = arith.constant 0 : i32
    %c0_i32_1 = arith.constant 0 : i32
    return %c0_i32, %c0_i32_0 : i32, i32
  }
  func.func @transform_5(%arg0: i32) -> (i32, i32) {
    %c0_i32 = arith.constant 0 : i32
    %c0_i32_0 = arith.constant 0 : i32
    return %arg0, %c0_i32 : i32, i32
  }
  func.func @transform_6(%arg0: i32) -> (i32, i32) {
    %c0_i32 = arith.constant 0 : i32
    %c0_i32_0 = arith.constant 0 : i32
    return %arg0, %c0_i32 : i32, i32
  }
}

</mosaic_0001>

<llo_original>
// kernel: tpu_custom_call.1
$region0: #{tpu_custom_call.1}
  #allocation0 [shape = 'u32[]', space=smem, size = 0x4, offset = 0x4, fixed_abs, tag = 'smem constant byte address 0x4 - core index']
  #allocation1 [shape = 'u32[144,128]{1,0:T(1,128)}', space=vmem, size = 0x12000, scoped, tag = 'internal scratch']
  #allocation2 [shape = 'f32[1]{0:T(128)S(6)}', space=smem, size = 0x200, scoped, tag = 'scoped memory for tpu_custom_call.1']
  %s0 = inlined_call_operand.<no memory space> [shape: f32[1], index: 0, kind: input, shape index: {}]
  %s1 = inlined_call_operand.hbm [shape: f32[8,128], index: 1, kind: input, shape index: {}]
  %s2 = inlined_call_operand.hbm [shape: bf16[128,128], index: 2, kind: input, shape index: {}]
  %s3 = inlined_call_operand.vmem [shape: f32[1,128], index: 3, kind: input, shape index: {}]
  %s4 = inlined_call_operand.vmem [shape: f32[3,128], index: 4, kind: input, shape index: {}]
  %s5 = inlined_call_operand.hbm [shape: f32[8,128], index: 5, kind: output, shape index: {0}]
  %s6 = inlined_call_operand.hbm [shape: f32[8,128], index: 6, kind: output, shape index: {1}]
  %7 = xla_tuple %s5, %s6
  %s8 = sld [smem:[#allocation0]]
  $region46: #{tpu_custom_call.1} parent=0
    _
  %s10 = ssub.s32 1, %s8
  %s11 = scalar_select 0, %s10, %s8
  %12 = sst [smem:[#allocation2]] %s0
  $region1: #{tpu_custom_call.1} parent=0
    #allocation3 [shape = 'u8[4096]{0}', space=vmem, size = 0x1000, scoped, tag = 'input window, operand 1, single buffered']
    #allocation4 [shape = 's32[1]{0}', space=sflag, size = 0x4, scoped, tag = 'scoped memory for tpu_custom_call.1']
    #allocation5 [shape = 's32[1]{0}', space=sflag, size = 0x4, scoped, tag = 'scoped memory for tpu_custom_call.1']
    #allocation6 [shape = 'u8[32768]{0}', space=vmem, size = 0x8000, scoped, tag = 'input window, operand 2, single buffered']
    #allocation7 [shape = 's32[1]{0}', space=sflag, size = 0x4, scoped, tag = 'scoped memory for tpu_custom_call.1']
    #allocation8 [shape = 'u8[4096]{0}', space=vmem, size = 0x1000, scoped, tag = 'output window, operand 0, single buffered']
    #allocation9 [shape = 'u8[4096]{0}', space=vmem, size = 0x1000, scoped, tag = 'output window, operand 1, single buffered']
    #allocation10 [shape = 's32[1]{0}', space=sflag, size = 0x4, scoped, tag = 'scoped memory for tpu_custom_call.1']
    %13 = vsyncpa [#allocation4], 0
    %14 = vsyncpa [#allocation7], 0
    %15 = vsyncpa [#allocation5], 0
    %16 = vsyncpa [#allocation10], 0
    // Predicated region
    $region2: #{tpu_custom_call.1} parent=1 // pred_check
      _
    $region3: #{tpu_custom_call.1} parent=1 // pred_check_branch
      %18 = sbr.rel (0) target = $region5
    $region4: #{tpu_custom_call.1} parent=1 // pred_region
      _
    $region5: #{tpu_custom_call.1} parent=1 // pred_fallthru
      _
    // Predicated region
    $region6: #{tpu_custom_call.1} parent=1 // pred_check
      _
    $region7: #{tpu_custom_call.1} parent=1 // pred_check_branch
      %20 = sbr.rel (0) target = $region9
    $region8: #{tpu_custom_call.1} parent=1 // pred_region
      %s22 = ssub.s32 128, 128
      %23 = vsyncadd [#allocation4], %s22
      %s25 = sshll.u32 [#allocation3], 4
      %s26 = int_to_ptr.vmem [resolvable:$true] %s25
      %28 = dma.hbm_to_vmem [thread:$0]  %s1, 128, %s26, [#allocation4]
    $region9: #{tpu_custom_call.1} parent=1 // pred_fallthru
      _
    // Predicated region
    $region10: #{tpu_custom_call.1} parent=1 // pred_check
      _
    $region11: #{tpu_custom_call.1} parent=1 // pred_check_branch
      %30 = sbr.rel (0) target = $region13
    $region12: #{tpu_custom_call.1} parent=1 // pred_region
      %s32 = ssub.s32 1024, 1024
      %33 = vsyncadd [#allocation7], %s32
      %s34 = sshll.u32 [#allocation6], 4
      %s35 = int_to_ptr.vmem [resolvable:$true] %s34
      %40 = dma.hbm_to_vmem [thread:$0]  %s2, 1024, %s35, [#allocation7], 64, 64, 4
    $region13: #{tpu_custom_call.1} parent=1 // pred_fallthru
      _
    // Predicated region
    $region14: #{tpu_custom_call.1} parent=1 // pred_check
      _
    $region15: #{tpu_custom_call.1} parent=1 // pred_check_branch
      %42 = sbr.rel (0) target = $region17
    $region16: #{tpu_custom_call.1} parent=1 // pred_region
      _
    $region17: #{tpu_custom_call.1} parent=1 // pred_fallthru
      _
    // Predicated region
    $region18: #{tpu_custom_call.1} parent=1 // pred_check
      _
    $region19: #{tpu_custom_call.1} parent=1 // pred_check_branch
      %44 = sbr.rel (0) target = $region21
    $region20: #{tpu_custom_call.1} parent=1 // pred_region
      _
    $region21: #{tpu_custom_call.1} parent=1 // pred_fallthru
      _
    // Predicated region
    $region22: #{tpu_custom_call.1} parent=1 // pred_check
      _
    $region23: #{tpu_custom_call.1} parent=1 // pred_check_branch
      %46 = sbr.rel (0) target = $region25
    $region24: #{tpu_custom_call.1} parent=1 // pred_region
      %47 = dma.done [#allocation4], 128
    $region25: #{tpu_custom_call.1} parent=1 // pred_fallthru
      _
    // Predicated region
    $region26: #{tpu_custom_call.1} parent=1 // pred_check
      _
    $region27: #{tpu_custom_call.1} parent=1 // pred_check_branch
      %49 = sbr.rel (0) target = $region29
    $region28: #{tpu_custom_call.1} parent=1 // pred_region
      %50 = dma.done [#allocation7], 1024
    $region29: #{tpu_custom_call.1} parent=1 // pred_fallthru
      _
    %v52 = vld [vmem:[#allocation3] sm:$0xff]
    %v53 = vld [vmem:[%s4] sm:$0x1]
    %v54 = vld [vmem:[%s4 + $0x1] sm:$0x1]
    %v55 = vld [vmem:[%s4 + $0x2] sm:$0x1]
    %v56 = vlaneseq
    %v57 = vshrl.u32 %v56, 7
    %v58 = vsub.s32 0, %v57
    %v59 = vrot.slane %v54, %v58
    %v60 = vmul.f32 %v59, %v52
    %61 = vrot.lane.b32.xlu0 %v52, 1
    %v62 = vpop.permute.xlu0 %61
    %v63 = vlaneseq
    %v64 = vshrl.u32 %v63, 7
    %v65 = vsub.s32 0, %v64
    %v66 = vrot.slane %v53, %v65
    %v67 = vmul.f32 %v66, %v62
    %v68 = vadd.f32 %v60, %v67
    %69 = vrot.lane.b32.xlu0 %v52, 127
    %v70 = vpop.permute.xlu0 %69
    %v71 = vlaneseq
    %v72 = vshrl.u32 %v71, 7
    %v73 = vsub.s32 0, %v72
    %v74 = vrot.slane %v55, %v73
    %v75 = vmul.f32 %v74, %v70
    %v76 = vadd.f32 %v68, %v75
    %v77 = vpack.c.bf16 %v52, %v52
    %v78 = vld [vmem:[#allocation6] sm:$0xf]
    %v79 = vld [vmem:[#allocation6 + $0x4] sm:$0xf]
    %v80 = vld [vmem:[#allocation6 + $0x8] sm:$0xf]
    %v81 = vld [vmem:[#allocation6 + $0xc] sm:$0xf]
    %v82 = vld [vmem:[#allocation6 + $0x10] sm:$0xf]
    %v83 = vld [vmem:[#allocation6 + $0x14] sm:$0xf]
    %v84 = vld [vmem:[#allocation6 + $0x18] sm:$0xf]
    %v85 = vld [vmem:[#allocation6 + $0x1c] sm:$0xf]
    %v86 = vld [vmem:[#allocation6 + $0x20] sm:$0xf]
    %v87 = vld [vmem:[#allocation6 + $0x24] sm:$0xf]
    %v88 = vld [vmem:[#allocation6 + $0x28] sm:$0xf]
    %v89 = vld [vmem:[#allocation6 + $0x2c] sm:$0xf]
    %v90 = vld [vmem:[#allocation6 + $0x30] sm:$0xf]
    %v91 = vld [vmem:[#allocation6 + $0x34] sm:$0xf]
    %v92 = vld [vmem:[#allocation6 + $0x38] sm:$0xf]
    %v93 = vld [vmem:[#allocation6 + $0x3c] sm:$0xf]
    %v94 = vld [vmem:[%s3] sm:$0x1]
    %v96 = vlaneseq
    %v97 = vshrl.u32 %v96, 7
    %v98 = vsub.s32 0, %v97
    %v99 = vrot.slane %v94, %v98
    %v117 = vunpack.c.l.b16 %v78
    %v118 = vunpack.c.l.b16 %v79
    %v119 = vunpack.c.l.b16 %v80
    %v120 = vunpack.c.l.b16 %v81
    %v121 = vunpack.c.l.b16 %v82
    %v122 = vunpack.c.l.b16 %v83
    %v123 = vunpack.c.l.b16 %v84
    %v124 = vunpack.c.l.b16 %v85
    %v125 = vunpack.c.l.b16 %v86
    %v126 = vunpack.c.l.b16 %v87
    %v127 = vunpack.c.l.b16 %v88
    %v128 = vunpack.c.l.b16 %v89
    %v129 = vunpack.c.l.b16 %v90
    %v130 = vunpack.c.l.b16 %v91
    %v131 = vunpack.c.l.b16 %v92
    %v132 = vunpack.c.l.b16 %v93
    %v133 = vpack.c.b16 %v118, %v117
    %v134 = vpack.c.b16 %v120, %v119
    %v135 = vpack.c.b16 %v122, %v121
    %v136 = vpack.c.b16 %v124, %v123
    %v137 = vpack.c.b16 %v126, %v125
    %v138 = vpack.c.b16 %v128, %v127
    %v139 = vpack.c.b16 %v130, %v129
    %v140 = vpack.c.b16 %v132, %v131
    %149 = vmatprep.subr.bf16.mxu0 0
    %150 = vmatpush1.bf16.msra.mxu0 %v140
    %151 = vmatprep.subr.bf16.mxu0 0
    %152 = vmatpush1.bf16.msra.mxu0 %v139
    %153 = vmatprep.subr.bf16.mxu0 0
    %154 = vmatpush1.bf16.msra.mxu0 %v138
    %155 = vmatprep.subr.bf16.mxu0 0
    %156 = vmatpush1.bf16.msra.mxu0 %v137
    %157 = vmatprep.subr.bf16.mxu0 0
    %158 = vmatpush1.bf16.msra.mxu0 %v136
    %159 = vmatprep.subr.bf16.mxu0 0
    %160 = vmatpush1.bf16.msra.mxu0 %v135
    %161 = vmatprep.subr.bf16.mxu0 0
    %162 = vmatpush1.bf16.msra.mxu0 %v134
    %163 = vmatprep.subr.bf16.mxu0 0
    %164 = vmatpush1.bf16.msra.mxu0 %v133
    %165 = vmatprep.subr.bf16.mxu0 0
    %166 = vmatpush2.bf16.msra.mxu0 0
    %167 = vmatprep.subr.bf16.mxu0 0
    %168 = vmatpush2.bf16.msra.mxu0 0
    %169 = vmatprep.subr.bf16.mxu0 0
    %170 = vmatpush2.bf16.msra.mxu0 0
    %171 = vmatprep.subr.bf16.mxu0 0
    %172 = vmatpush2.bf16.msra.mxu0 0
    %173 = vmatprep.subr.bf16.mxu0 0
    %174 = vmatpush2.bf16.msra.mxu0 0
    %175 = vmatprep.subr.bf16.mxu0 0
    %176 = vmatpush2.bf16.msra.mxu0 0
    %177 = vmatprep.subr.bf16.mxu0 0
    %178 = vmatpush2.bf16.msra.mxu0 0
    %179 = vmatprep.subr.bf16.mxu0 0
    %180 = vmatpush2.bf16.msra.mxu0 0
    %181 = vmatprep.mubr.bf16.mxu0 0
    %182 = vmatmul.mubr.bf16.gmra.mxu0 %v77
    %v183 = vpop.f32.mrf.mxu0
    %v184 = vadd.f32 %v99, %v183
    %v185 = vpop.f32.mrf.mxu0
    %v186 = vpop.f32.mrf.mxu0
    %v187 = vpop.f32.mrf.mxu0
    %188 = vdwg.mxu0
    %189 = vadd.xlane.f32.xlu0 %v76
    %v190 = vpop.xlane.xlu0 %189
    %191 = vadd.xlane.f32.xlu0 %v184
    %v192 = vpop.xlane.xlu0 %191
    %v193 = vmul.f32 %v184, %v190
    %v194 = vmul.f32 %v193, 0.5
    %v195 = vtanh.pop %v194
    %v196 = vmul.f32 %v195, 0.5
    %v197 = vadd.f32 %v196, 0.5
    %v198 = vmul.f32 %v76, %v192
    %v199 = vmul.f32 %v198, 0.5
    %v200 = vtanh.pop %v199
    %v201 = vmul.f32 %v200, 0.5
    %v202 = vadd.f32 %v201, 0.5
    %s203 = sld [smem:[#allocation2]]
    %v204 = vsub.f32 %v197, %v202
    %v205 = vstv %s203
    %v206 = vmul.f32 %v205, %v204
    %v207 = vadd.f32 %v202, %v206
    %v208 = vmul.f32 %v59, %v207
    %209 = vrot.lane.b32.xlu0 %v207, 1
    %v210 = vpop.permute.xlu0 %209
    %v211 = vmul.f32 %v66, %v210
    %v212 = vadd.f32 %v208, %v211
    %213 = vrot.lane.b32.xlu0 %v207, 127
    %v214 = vpop.permute.xlu0 %213
    %v215 = vmul.f32 %v74, %v214
    %v216 = vadd.f32 %v212, %v215
    %v217 = vmul.f32 %v216, 0.5
    %v218 = vtanh.pop %v217
    %v219 = vmul.f32 %v218, 0.5
    %v220 = vadd.f32 %v219, 0.5
    %221 = vst [vmem:[#allocation9] sm:$0xff] %v220
    %v222 = vmul.f32 %v52, %v220
    %223 = vst [vmem:[#allocation8] sm:$0xff] %v222
    // Predicated region
    $region30: #{tpu_custom_call.1} parent=1 // pred_check
      _
    $region31: #{tpu_custom_call.1} parent=1 // pred_check_branch
      %225 = sbr.rel (0) target = $region33
    $region32: #{tpu_custom_call.1} parent=1 // pred_region
      %s227 = ssub.s32 128, 128
      %228 = vsyncadd [#allocation5], %s227
      %s230 = sshll.u32 [#allocation8], 4
      %s231 = int_to_ptr.vmem [resolvable:$true] %s230
      %233 = dma.vmem_to_hbm [thread:$0]  %s231, 128, %s5, [#allocation5]
    $region33: #{tpu_custom_call.1} parent=1 // pred_fallthru
      _
    // Predicated region
    $region34: #{tpu_custom_call.1} parent=1 // pred_check
      _
    $region35: #{tpu_custom_call.1} parent=1 // pred_check_branch
      %235 = sbr.rel (0) target = $region37
    $region36: #{tpu_custom_call.1} parent=1 // pred_region
      %s237 = ssub.s32 128, 128
      %238 = vsyncadd [#allocation10], %s237
      %s240 = sshll.u32 [#allocation9], 4
      %s241 = int_to_ptr.vmem [resolvable:$true] %s240
      %243 = dma.vmem_to_hbm [thread:$0]  %s241, 128, %s6, [#allocation10]
    $region37: #{tpu_custom_call.1} parent=1 // pred_fallthru
      _
    // Predicated region
    $region38: #{tpu_custom_call.1} parent=1 // pred_check
      _
    $region39: #{tpu_custom_call.1} parent=1 // pred_check_branch
      %245 = sbr.rel (0) target = $region41
    $region40: #{tpu_custom_call.1} parent=1 // pred_region
      %246 = dma.done [#allocation5], 128
    $region41: #{tpu_custom_call.1} parent=1 // pred_fallthru
      _
    // Predicated region
    $region42: #{tpu_custom_call.1} parent=1 // pred_check
      _
    $region43: #{tpu_custom_call.1} parent=1 // pred_check_branch
      %248 = sbr.rel (0) target = $region45
    $region44: #{tpu_custom_call.1} parent=1 // pred_region
      %249 = dma.done [#allocation10], 128
    $region45: #{tpu_custom_call.1} parent=1 // pred_fallthru
      _
    %250 = vsyncpa [#allocation4], 1
    %251 = vsyncpa [#allocation7], 1
    %252 = vsyncpa [#allocation5], 1
    %253 = vsyncpa [#allocation10], 1

</llo_original>
